<compile_context>
chip_gen: v7x
topology: tpu7x:2x2x1
jax: 0.10.0
libtpu: 0.0.40
codegen_flags: <defaults>
</compile_context>

<pallas_src>
import jax
import jax.numpy as jnp
from jax.experimental import pallas as pl
from jax.experimental.pallas import tpu as pltpu


def _round_up(x, m):
    return (x + m - 1) // m * m


def cnn_kernel(emb_ref, wconv_ref, bconv_ref, wfc_ref, bfc_ref, out_ref):
    """Conv (KH tap matmuls + shifted adds) + ReLU + global max-pool + Linear."""
    TB, S, E = emb_ref.shape            # bf16 embedding tile
    KH, _, Cp = wconv_ref.shape         # bf16 conv weights, C padded to 128
    pad = (KH - 1) // 2                 # wrapper asserts KH == 2*pad + 1

    emb2d = emb_ref[...].reshape(TB * S, E)

    # Conv2d(1,C,(KH,E),padding=(pad,0)) == sum over taps k of a full-length
    # (TB*S,E)@(E,Cp) matmul whose result is shifted by (k - pad) rows along
    # the sequence, with out-of-range rows (the implicit zero padding) dropped.
    conv = jnp.zeros((TB, S, Cp), jnp.float32)
    for k in range(KH):                 # static unroll -> KH MXU matmuls
        y = jnp.dot(emb2d, wconv_ref[k],
                    preferred_element_type=jnp.float32).reshape(TB, S, Cp)
        d = k - pad                     # conv[t] += y[t + d]  (0 <= t+d < S)
        if d == 0:
            conv = conv + y
        elif d > 0:
            zpad = jnp.zeros((TB, d, Cp), jnp.float32)
            conv = conv + jnp.concatenate([y[:, d:, :], zpad], axis=1)
        else:
            zpad = jnp.zeros((TB, -d, Cp), jnp.float32)
            conv = conv + jnp.concatenate([zpad, y[:, :S + d, :]], axis=1)

    act = jnp.maximum(conv + bconv_ref[...], 0.0)        # ReLU in f32 (VPU)
    pooled = jnp.max(act, axis=1)                        # (TB, Cp) global max pool

    # TODO(synk): Dropout(p=0.3) is identity for this inference-mode forward;
    # a training-mode mask would use pltpu.prng_seed / pltpu.prng_random_bits.
    logits = jnp.dot(pooled, wfc_ref[...],
                     preferred_element_type=jnp.float32) + bfc_ref[...]
    out_ref[...] = logits.astype(out_ref.dtype)


def cnn_forward(x_ids, emb_table, wconv_pt, bconv, wfc_pt, bfc,
                *, padding=1, block_b=8):
    """x_ids: (B,S) int32.  Params in PyTorch layout:
         wconv_pt (C,1,KH,E), bconv (C,), wfc_pt (O,C), bfc (O,).
       Returns (B, O) float32 logits."""
    B, S = x_ids.shape
    C, _, KH, E = wconv_pt.shape
    O = wfc_pt.shape[0]
    # Kernel assumes conv output length == S (true for the module defaults
    # kernel_heights=3, padding=1; generally whenever KH == 2*padding + 1).
    assert KH == 2 * padding + 1, "cnn_forward requires kernel_heights == 2*padding + 1"

    # ---- weight preprocessing (lane-dense padding, bf16 conv weights) ----
    Cp = _round_up(C, 128)
    Op = _round_up(O, 128)
    wconv = jnp.transpose(wconv_pt[:, 0], (1, 2, 0))               # (KH, E, C)
    wconv_p = jnp.zeros((KH, E, Cp), jnp.bfloat16)
    wconv_p = wconv_p.at[:, :, :C].set(wconv.astype(jnp.bfloat16))
    bconv_p = jnp.zeros((1, Cp), jnp.float32).at[:, :C].set(bconv.reshape(1, C))
    wfc_p = jnp.zeros((Cp, Op), jnp.float32).at[:C, :O].set(wfc_pt.T)
    bfc_p = jnp.zeros((1, Op), jnp.float32).at[:, :O].set(bfc.reshape(1, O))

    # ---- embedding gather (bf16 stream), no HBM sequence padding ----
    emb = jnp.take(emb_table.astype(jnp.bfloat16), x_ids, axis=0)  # (B, S, E)

    # ---- batch tiling ----
    tb = min(block_b, B)
    Bp = _round_up(B, tb)
    if Bp != B:
        emb = jnp.pad(emb, ((0, Bp - B), (0, 0), (0, 0)))
    grid = (Bp // tb,)

    out = pl.pallas_call(
        cnn_kernel,
        out_shape=jax.ShapeDtypeStruct((Bp, Op), jnp.float32),
        grid_spec=pltpu.PrefetchScalarGridSpec(
            num_scalar_prefetch=0,
            grid=grid,
            in_specs=[
                # Batch-tiled embedding stream (double-buffered by Pallas).
                pl.BlockSpec((tb, S, E), lambda i: (i, 0, 0)),
                # Weights/biases: constant index map -> resident across steps.
                pl.BlockSpec((KH, E, Cp), lambda i: (0, 0, 0)),
                pl.BlockSpec((1, Cp), lambda i: (0, 0)),
                pl.BlockSpec((Cp, Op), lambda i: (0, 0)),
                pl.BlockSpec((1, Op), lambda i: (0, 0)),
            ],
            out_specs=pl.BlockSpec((tb, Op), lambda i: (i, 0)),
        ),
        compiler_params=pltpu.CompilerParams(
            # Batch grid axis is independent -> megacore sharding on v7x.
            dimension_semantics=("parallel",),
        ),
    )(emb, wconv_p, bconv_p, wfc_p, bfc_p)
    return out[:B, :O]


def ref_forward(x_ids, emb_table, wconv_pt, bconv, wfc_pt, bfc, *, padding=1):
    """Pure-JAX f32 reference replicating the PyTorch forward (dropout = eval)."""
    emb = emb_table[x_ids]                                         # (B, S, E)
    emb_p = jnp.pad(emb, ((0, 0), (padding, padding), (0, 0)))
    C, _, KH, E = wconv_pt.shape
    S = x_ids.shape[1]
    w = jnp.transpose(wconv_pt[:, 0], (1, 2, 0))                   # (KH, E, C)
    conv = sum(jnp.einsum("bte,ec->btc", emb_p[:, k:k + S, :], w[k])
               for k in range(KH)) + bconv
    act = jnp.maximum(conv, 0.0)
    pooled = jnp.max(act, axis=1)
    return pooled @ wfc_pt.T + bfc


def ref_forward_bf16(x_ids, emb_table, wconv_pt, bconv, wfc_pt, bfc, *, padding=1):
    """Reference with the same bf16 input casts / f32 accumulation as the kernel."""
    emb = emb_table.astype(jnp.bfloat16)[x_ids]
    emb_p = jnp.pad(emb, ((0, 0), (padding, padding), (0, 0)))
    C, _, KH, E = wconv_pt.shape
    S = x_ids.shape[1]
    w = jnp.transpose(wconv_pt[:, 0], (1, 2, 0)).astype(jnp.bfloat16)
    conv = sum(jnp.einsum("bte,ec->btc", emb_p[:, k:k + S, :], w[k],
                          preferred_element_type=jnp.float32)
               for k in range(KH)) + bconv
    act = jnp.maximum(conv, 0.0)
    pooled = jnp.max(act, axis=1)
    return pooled @ wfc_pt.T + bfc


if __name__ == "__main__":
    # Small shapes consistent with the module's forward (original: E=300, C=100).
    B, S = 16, 16            # batch, sequence length (grid of 2 batch tiles of 8)
    V, PAD_IDX = 50, 0       # vocab_size, padding_idx
    E = 32                   # emb_size
    C = 16                   # out_channels
    O = 4                    # output_size
    KH, PADDING = 3, 1       # kernel_heights, padding

    key = jax.random.PRNGKey(0)
    k_ids, k_emb, k_wc, k_bc, k_wf, k_bf = jax.random.split(key, 6)

    # Parameters in PyTorch layouts.
    emb_table = jax.random.normal(k_emb, (V, E), jnp.float32)
    emb_table = emb_table.at[PAD_IDX].set(0.0)                      # padding_idx row
    wconv_pt = jax.random.normal(k_wc, (C, 1, KH, E), jnp.float32) * 0.1
    bconv = jax.random.normal(k_bc, (C,), jnp.float32) * 0.1
    wfc_pt = jax.random.normal(k_wf, (O, C), jnp.float32) * 0.1
    bfc = jax.random.normal(k_bf, (O,), jnp.float32) * 0.1

    x_ids = jax.random.randint(k_ids, (B, S), 0, V, jnp.int32)

    out = cnn_forward(x_ids, emb_table, wconv_pt, bconv, wfc_pt, bfc,
                      padding=PADDING, block_b=8)
    out = jax.block_until_ready(out)
    assert out.shape == (B, O)

    # Tight check vs a reference that mirrors the kernel's bf16 input casts.
    ref_bf = ref_forward_bf16(x_ids, emb_table, wconv_pt, bconv, wfc_pt, bfc,
                              padding=PADDING)
    assert jnp.allclose(out, ref_bf, atol=5e-3, rtol=5e-3), "mismatch vs bf16-matched ref"

    # Loose check vs the pure-f32 PyTorch-semantic reference (bf16 input error).
    ref_32 = ref_forward(x_ids, emb_table, wconv_pt, bconv, wfc_pt, bfc,
                         padding=PADDING)
    assert jnp.allclose(out, ref_32, atol=5e-2, rtol=5e-2), "mismatch vs f32 reference"

    print("KERNEL_OK")
</pallas_src>

<mosaic_0001>
module attributes {stable_mosaic.version = 11 : i64} {
  func.func @cnn_kernel(%arg0: i32, %arg1: memref<8x16x32xbf16, #tpu.memory_space<vmem>>, %arg2: memref<3x32x128xbf16, #tpu.memory_space<vmem>>, %arg3: memref<1x128xf32, #tpu.memory_space<vmem>>, %arg4: memref<128x128xf32, #tpu.memory_space<vmem>>, %arg5: memref<1x128xf32, #tpu.memory_space<vmem>>, %arg6: memref<8x128xf32, #tpu.memory_space<vmem>>) attributes {dimension_semantics = [#tpu.dimension_semantics<parallel>], iteration_bounds = array<i64: 2>, scalar_prefetch = 0 : i64, scratch_operands = 0 : i64, tpu.core_type = #tpu.core_type<tc>, window_params = [{transform_indices = @transform_0, window_bounds = array<i64: 8, 16, 32>}, {pipeline_mode = #tpu.pipeline_mode<synchronous>, transform_indices = @transform_1, window_bounds = array<i64: 3, 32, 128>}, {pipeline_mode = #tpu.pipeline_mode<synchronous>, transform_indices = @transform_2, window_bounds = array<i64: 1, 128>}, {pipeline_mode = #tpu.pipeline_mode<synchronous>, transform_indices = @transform_3, window_bounds = array<i64: 128, 128>}, {pipeline_mode = #tpu.pipeline_mode<synchronous>, transform_indices = @transform_4, window_bounds = array<i64: 1, 128>}, {transform_indices = @transform_5, window_bounds = array<i64: 8, 128>}]} {
    %c0 = arith.constant 0 : index
    %c0_0 = arith.constant 0 : index
    %c0_1 = arith.constant 0 : index
    %0 = vector.load %arg1[%c0, %c0_0, %c0_1] : memref<8x16x32xbf16, #tpu.memory_space<vmem>>, vector<8x16x32xbf16>
    %1 = vector.shape_cast %0 : vector<8x16x32xbf16> to vector<128x32xbf16>
    %cst = arith.constant 0.000000e+00 : f32
    %2 = vector.broadcast %cst : f32 to vector<8x16x128xf32>
    %c0_2 = arith.constant 0 : index
    %c0_3 = arith.constant 0 : index
    %c0_4 = arith.constant 0 : index
    %3 = vector.load %arg2[%c0_2, %c0_3, %c0_4] : memref<3x32x128xbf16, #tpu.memory_space<vmem>>, vector<1x32x128xbf16>
    %4 = vector.shape_cast %3 : vector<1x32x128xbf16> to vector<32x128xbf16>
    %cst_5 = arith.constant dense<0.000000e+00> : vector<128x128xf32>
    %5 = tpu.matmul %1, %4, %cst_5 {dimension_numbers = #tpu.dot_dimension_numbers<[1], [0], [0], [1], [0, 0, 1, 1], [], []>} : vector<128x32xbf16>, vector<32x128xbf16>, vector<128x128xf32> -> vector<128x128xf32>
    %6 = vector.shape_cast %5 : vector<128x128xf32> to vector<8x16x128xf32>
    %cst_6 = arith.constant 0.000000e+00 : f32
    %7 = vector.broadcast %cst_6 : f32 to vector<8x1x128xf32>
    %8 = vector.extract_strided_slice %6 {offsets = [0, 0, 0], sizes = [8, 15, 128], strides = [1, 1, 1]} : vector<8x16x128xf32> to vector<8x15x128xf32>
    %9 = tpu.concatenate %7, %8 in 1 : vector<8x1x128xf32>, vector<8x15x128xf32> -> vector<8x16x128xf32>
    %10 = arith.addf %2, %9 : vector<8x16x128xf32>
    %c1 = arith.constant 1 : index
    %c0_7 = arith.constant 0 : index
    %c0_8 = arith.constant 0 : index
    %11 = vector.load %arg2[%c1, %c0_7, %c0_8] : memref<3x32x128xbf16, #tpu.memory_space<vmem>>, vector<1x32x128xbf16>
    %12 = vector.shape_cast %11 : vector<1x32x128xbf16> to vector<32x128xbf16>
    %cst_9 = arith.constant dense<0.000000e+00> : vector<128x128xf32>
    %13 = tpu.matmul %1, %12, %cst_9 {dimension_numbers = #tpu.dot_dimension_numbers<[1], [0], [0], [1], [0, 0, 1, 1], [], []>} : vector<128x32xbf16>, vector<32x128xbf16>, vector<128x128xf32> -> vector<128x128xf32>
    %14 = vector.shape_cast %13 : vector<128x128xf32> to vector<8x16x128xf32>
    %15 = arith.addf %10, %14 : vector<8x16x128xf32>
    %c2 = arith.constant 2 : index
    %c0_10 = arith.constant 0 : index
    %c0_11 = arith.constant 0 : index
    %16 = vector.load %arg2[%c2, %c0_10, %c0_11] : memref<3x32x128xbf16, #tpu.memory_space<vmem>>, vector<1x32x128xbf16>
    %17 = vector.shape_cast %16 : vector<1x32x128xbf16> to vector<32x128xbf16>
    %cst_12 = arith.constant dense<0.000000e+00> : vector<128x128xf32>
    %18 = tpu.matmul %1, %17, %cst_12 {dimension_numbers = #tpu.dot_dimension_numbers<[1], [0], [0], [1], [0, 0, 1, 1], [], []>} : vector<128x32xbf16>, vector<32x128xbf16>, vector<128x128xf32> -> vector<128x128xf32>
    %19 = vector.shape_cast %18 : vector<128x128xf32> to vector<8x16x128xf32>
    %cst_13 = arith.constant 0.000000e+00 : f32
    %20 = vector.broadcast %cst_13 : f32 to vector<8x1x128xf32>
    %21 = vector.extract_strided_slice %19 {offsets = [0, 1, 0], sizes = [8, 15, 128], strides = [1, 1, 1]} : vector<8x16x128xf32> to vector<8x15x128xf32>
    %22 = tpu.concatenate %21, %20 in 1 : vector<8x15x128xf32>, vector<8x1x128xf32> -> vector<8x16x128xf32>
    %23 = arith.addf %15, %22 : vector<8x16x128xf32>
    %c0_14 = arith.constant 0 : index
    %c0_15 = arith.constant 0 : index
    %24 = vector.load %arg3[%c0_14, %c0_15] : memref<1x128xf32, #tpu.memory_space<vmem>>, vector<1x128xf32>
    %25 = vector.shape_cast %24 : vector<1x128xf32> to vector<1x1x128xf32>
    %26 = vector.broadcast %25 : vector<1x1x128xf32> to vector<8x16x128xf32>
    %27 = arith.addf %23, %26 : vector<8x16x128xf32>
    %cst_16 = arith.constant 0.000000e+00 : f32
    %28 = vector.broadcast %cst_16 : f32 to vector<8x16x128xf32>
    %29 = arith.maximumf %27, %28 : vector<8x16x128xf32>
    %cst_17 = arith.constant dense<0xFF800000> : vector<8x128xf32>
    %30 = vector.multi_reduction <maximumf>, %29, %cst_17 [1] : vector<8x16x128xf32> to vector<8x128xf32>
    %c0_18 = arith.constant 0 : index
    %c0_19 = arith.constant 0 : index
    %31 = vector.load %arg4[%c0_18, %c0_19] : memref<128x128xf32, #tpu.memory_space<vmem>>, vector<128x128xf32>
    %cst_20 = arith.constant dense<0.000000e+00> : vector<8x128xf32>
    %32 = tpu.matmul %30, %31, %cst_20 {dimension_numbers = #tpu.dot_dimension_numbers<[1], [0], [0], [1], [0, 0, 1, 1], [], []>} : vector<8x128xf32>, vector<128x128xf32>, vector<8x128xf32> -> vector<8x128xf32>
    %c0_21 = arith.constant 0 : index
    %c0_22 = arith.constant 0 : index
    %33 = vector.load %arg5[%c0_21, %c0_22] : memref<1x128xf32, #tpu.memory_space<vmem>>, vector<1x128xf32>
    %34 = vector.broadcast %33 : vector<1x128xf32> to vector<8x128xf32>
    %35 = arith.addf %32, %34 : vector<8x128xf32>
    %c0_23 = arith.constant 0 : index
    %c0_24 = arith.constant 0 : index
    %36 = vector.load %arg6[%c0_23, %c0_24] : memref<8x128xf32, #tpu.memory_space<vmem>>, vector<8x128xf32>
    tpu.vector_store %arg6[%c0_23, %c0_24], %35 {strides = array<i32>} : memref<8x128xf32, #tpu.memory_space<vmem>>, vector<8x128xf32>,
    return
  }
  func.func @transform_0(%arg0: i32) -> (i32, i32, i32) {
    %c0_i32 = arith.constant 0 : i32
    %c0_i32_0 = arith.constant 0 : i32
    %c0_i32_1 = arith.constant 0 : i32
    return %arg0, %c0_i32, %c0_i32_0 : i32, i32, i32
  }
  func.func @transform_1(%arg0: i32) -> (i32, i32, i32) {
    %c0_i32 = arith.constant 0 : i32
    %c0_i32_0 = arith.constant 0 : i32
    %c0_i32_1 = arith.constant 0 : i32
    %c0_i32_2 = arith.constant 0 : i32
    return %c0_i32, %c0_i32_0, %c0_i32_1 : i32, i32, i32
  }
  func.func @transform_2(%arg0: i32) -> (i32, i32) {
    %c0_i32 = arith.constant 0 : i32
    %c0_i32_0 = arith.constant 0 : i32
    %c0_i32_1 = arith.constant 0 : i32
    return %c0_i32, %c0_i32_0 : i32, i32
  }
  func.func @transform_3(%arg0: i32) -> (i32, i32) {
    %c0_i32 = arith.constant 0 : i32
    %c0_i32_0 = arith.constant 0 : i32
    %c0_i32_1 = arith.constant 0 : i32
    return %c0_i32, %c0_i32_0 : i32, i32
  }
  func.func @transform_4(%arg0: i32) -> (i32, i32) {
    %c0_i32 = arith.constant 0 : i32
    %c0_i32_0 = arith.constant 0 : i32
    %c0_i32_1 = arith.constant 0 : i32
    return %c0_i32, %c0_i32_0 : i32, i32
  }
  func.func @transform_5(%arg0: i32) -> (i32, i32) {
    %c0_i32 = arith.constant 0 : i32
    %c0_i32_0 = arith.constant 0 : i32
    return %arg0, %c0_i32 : i32, i32
  }
}

</mosaic_0001>

<llo_original>
// kernel: tpu_custom_call.1
$region0: #{tpu_custom_call.1}
  #allocation0 [shape = 'u32[]', space=smem, size = 0x4, offset = 0x4, fixed_abs, tag = 'smem constant byte address 0x4 - core index']
  #allocation1 [shape = 'u32[144,128]{1,0:T(1,128)}', space=vmem, size = 0x12000, scoped, tag = 'internal scratch']
  %s0 = inlined_call_operand.hbm [shape: bf16[16,16,32], index: 0, kind: input, shape index: {}]
  %s1 = inlined_call_operand.hbm [shape: bf16[3,32,128], index: 1, kind: input, shape index: {}]
  %s2 = inlined_call_operand.vmem [shape: f32[1,128], index: 2, kind: input, shape index: {}]
  %s3 = inlined_call_operand.hbm [shape: f32[128,128], index: 3, kind: input, shape index: {}]
  %s4 = inlined_call_operand.vmem [shape: f32[1,128], index: 4, kind: input, shape index: {}]
  %s5 = inlined_call_operand.hbm [shape: f32[16,128], index: 5, kind: output, shape index: {}]
  %s6 = sld [smem:[#allocation0]]
  $region65: #{tpu_custom_call.1} parent=0
    _
  %s8 = ssub.s32 1, %s6
  %s9 = scalar_select 0, %s8, %s6
  $region1: #{tpu_custom_call.1} parent=0
    #allocation2 [shape = 'u8[65536]{0}', space=vmem, size = 0x10000, scoped, tag = 'input window, operand 0']
    #allocation3 [shape = 's32[2]{0}', space=sflag, size = 0x8, scoped, tag = 'scoped memory for tpu_custom_call.1']
    #allocation4 [shape = 's32[2]{0}', space=sflag, size = 0x8, scoped, tag = 'scoped memory for tpu_custom_call.1']
    #allocation5 [shape = 'u8[24576]{0}', space=vmem, size = 0x6000, scoped, tag = 'input window, operand 1, single buffered']
    #allocation6 [shape = 's32[1]{0}', space=sflag, size = 0x4, scoped, tag = 'scoped memory for tpu_custom_call.1']
    #allocation7 [shape = 'u8[65536]{0}', space=vmem, size = 0x10000, scoped, tag = 'input window, operand 3, single buffered']
    #allocation8 [shape = 'u8[8192]{0}', space=vmem, size = 0x2000, scoped, tag = 'output window, operand 0']
    %10 = vsyncpa [#allocation3], 0
    %s11 = scalar_lea.sflag [#allocation3], 1
    %12 = vsyncpa %s11, 0
    %13 = vsyncpa [#allocation6], 0
    %14 = vsyncpa [#allocation4], 0
    %s15 = scalar_lea.sflag [#allocation4], 1
    %16 = vsyncpa %s15, 0
    loop: start=0, step=1, limit=4
    $region2: #{tpu_custom_call.1} parent=1 // loop_pre_header
      _
    $region3: #{tpu_custom_call.1} parent=1 // loop_header
      %s18 = sphi 0, %s22
      %p19 = scmp.ge.s32.totalorder %s18, 4
      %s28 = sphi 0, %s30
      %s31 = sphi 0, %s28
      %s32 = sphi 0, %s31
      %s48 = sphi 0, %s32
      %s52 = sphi 0, %s52
      %s54 = sphi 0, %s52
      %s55 = sphi 0, %s54
      %s69 = sphi 0, %s55
      %s73 = sphi 0, %s73
      %s75 = sphi 0, %s73
      %s76 = sphi 0, %s75
      %s90 = sphi 0, %s76
      %s94 = sphi 0, %s94
      %s96 = sphi 0, %s94
      %s97 = sphi 0, %s96
      %s111 = sphi 0, %s97
      %s115 = sphi 0, %s115
      %s117 = sphi 0, %s115
      %s118 = sphi 0, %s117
      %s132 = sphi 0, %s118
      %s138 = sphi 0, %s140
      %s141 = sphi 0, %s138
      %s142 = sphi 0, %s141
      %s158 = sphi 0, %s142
    $region4: #{tpu_custom_call.1} parent=1 // loop_header_branch
      %21 = sbr.rel (%p19) target = $region8
    $region5: #{tpu_custom_call.1} parent=1 // loop_body
      %s23 = ssub.s32 %s18, 1
      %s24 = ssub.s32 %s18, 2
      %s25 = sadd.s32 %s18, 1
      %s26 = ssub.s32 %s18, %s25
      %p27 = scmp.eq.s32.totalorder %s26, 0
      %s29 = sadd.s32 %s28, 1
      %s30 = scalar_select %p27, %s28, %s29
      %p33 = pneg %p27
      %p34 = scmp.eq.s32.totalorder %s18, 1
      %p35 = por %p33, %p34
      %p36 = scmp.ne.s32.totalorder %s28, %s31
      %p37 = scmp.eq.s32.totalorder %s18, 0
      %p38 = por %p36, %p37
      %p39 = scmp.ne.s32.totalorder %s28, %s31
      %p40 = scmp.eq.s32.totalorder %s23, 1
      %p41 = por %p39, %p40
      %p42 = scmp.ne.s32.totalorder %s31, %s32
      %p43 = scmp.eq.s32.totalorder %s23, 0
      %p44 = por %p42, %p43
      %p45 = scmp.ne.s32.totalorder %s31, %s32
      %p46 = scmp.eq.s32.totalorder %s24, 1
      %p47 = por %p45, %p46
      %p49 = scmp.ne.s32.totalorder %s32, %s48
      %p50 = scmp.eq.s32.totalorder %s24, 0
      %p51 = por %p49, %p50
      %s53 = sadd.s32 %s52, 1
      %p56 = scmp.eq.s32.totalorder %s18, 1
      %p57 = scmp.ne.s32.totalorder %s52, %s54
      %p58 = scmp.eq.s32.totalorder %s18, 0
      %p59 = por %p57, %p58
      %p60 = scmp.ne.s32.totalorder %s52, %s54
      %p61 = scmp.eq.s32.totalorder %s23, 1
      %p62 = por %p60, %p61
      %p63 = scmp.ne.s32.totalorder %s54, %s55
      %p64 = scmp.eq.s32.totalorder %s23, 0
      %p65 = por %p63, %p64
      %p66 = scmp.ne.s32.totalorder %s54, %s55
      %p67 = scmp.eq.s32.totalorder %s24, 1
      %p68 = por %p66, %p67
      %p70 = scmp.ne.s32.totalorder %s55, %s69
      %p71 = scmp.eq.s32.totalorder %s24, 0
      %p72 = por %p70, %p71
      %s74 = sadd.s32 %s73, 1
      %p77 = scmp.eq.s32.totalorder %s18, 1
      %p78 = scmp.ne.s32.totalorder %s73, %s75
      %p79 = scmp.eq.s32.totalorder %s18, 0
      %p80 = por %p78, %p79
      %p81 = scmp.ne.s32.totalorder %s73, %s75
      %p82 = scmp.eq.s32.totalorder %s23, 1
      %p83 = por %p81, %p82
      %p84 = scmp.ne.s32.totalorder %s75, %s76
      %p85 = scmp.eq.s32.totalorder %s23, 0
      %p86 = por %p84, %p85
      %p87 = scmp.ne.s32.totalorder %s75, %s76
      %p88 = scmp.eq.s32.totalorder %s24, 1
      %p89 = por %p87, %p88
      %p91 = scmp.ne.s32.totalorder %s76, %s90
      %p92 = scmp.eq.s32.totalorder %s24, 0
      %p93 = por %p91, %p92
      %s95 = sadd.s32 %s94, 1
      %p98 = scmp.eq.s32.totalorder %s18, 1
      %p99 = scmp.ne.s32.totalorder %s94, %s96
      %p100 = scmp.eq.s32.totalorder %s18, 0
      %p101 = por %p99, %p100
      %p102 = scmp.ne.s32.totalorder %s94, %s96
      %p103 = scmp.eq.s32.totalorder %s23, 1
      %p104 = por %p102, %p103
      %p105 = scmp.ne.s32.totalorder %s96, %s97
      %p106 = scmp.eq.s32.totalorder %s23, 0
      %p107 = por %p105, %p106
      %p108 = scmp.ne.s32.totalorder %s96, %s97
      %p109 = scmp.eq.s32.totalorder %s24, 1
      %p110 = por %p108, %p109
      %p112 = scmp.ne.s32.totalorder %s97, %s111
      %p113 = scmp.eq.s32.totalorder %s24, 0
      %p114 = por %p112, %p113
      %s116 = sadd.s32 %s115, 1
      %p119 = scmp.eq.s32.totalorder %s18, 1
      %p120 = scmp.ne.s32.totalorder %s115, %s117
      %p121 = scmp.eq.s32.totalorder %s18, 0
      %p122 = por %p120, %p121
      %p123 = scmp.ne.s32.totalorder %s115, %s117
      %p124 = scmp.eq.s32.totalorder %s23, 1
      %p125 = por %p123, %p124
      %p126 = scmp.ne.s32.totalorder %s117, %s118
      %p127 = scmp.eq.s32.totalorder %s23, 0
      %p128 = por %p126, %p127
      %p129 = scmp.ne.s32.totalorder %s117, %s118
      %p130 = scmp.eq.s32.totalorder %s24, 1
      %p131 = por %p129, %p130
      %p133 = scmp.ne.s32.totalorder %s118, %s132
      %p134 = scmp.eq.s32.totalorder %s24, 0
      %p135 = por %p133, %p134
      %s136 = ssub.s32 %s18, %s25
      %p137 = scmp.eq.s32.totalorder %s136, 0
      %s139 = sadd.s32 %s138, 1
      %s140 = scalar_select %p137, %s138, %s139
      %p143 = pneg %p137
      %p144 = scmp.eq.s32.totalorder %s18, 1
      %p145 = por %p143, %p144
      %p146 = scmp.ne.s32.totalorder %s138, %s141
      %p147 = scmp.eq.s32.totalorder %s18, 0
      %p148 = por %p146, %p147
      %p149 = scmp.ne.s32.totalorder %s138, %s141
      %p150 = scmp.eq.s32.totalorder %s23, 1
      %p151 = por %p149, %p150
      %p152 = scmp.ne.s32.totalorder %s141, %s142
      %p153 = scmp.eq.s32.totalorder %s23, 0
      %p154 = por %p152, %p153
      %p155 = scmp.ne.s32.totalorder %s141, %s142
      %p156 = scmp.eq.s32.totalorder %s24, 1
      %p157 = por %p155, %p156
      %p159 = scmp.ne.s32.totalorder %s142, %s158
      %p160 = scmp.eq.s32.totalorder %s24, 0
      %p161 = por %p159, %p160
      %p162 = scmp.le.s32.totalorder 1, %s18
      %p163 = scmp.lt.s32.totalorder %s18, 3
      %p164 = pnand %p162, %p163
      %p165 = pneg %p164
      // Predicated region
      $region9: #{tpu_custom_call.1} parent=5 // pred_check
        _
      $region10: #{tpu_custom_call.1} parent=5 // pred_check_branch
        %167 = sbr.rel (%p164) target = $region12
      $region11: #{tpu_custom_call.1} parent=5 // pred_region
        %s168 = ssub.s32 %s18, 1
        // Predicated region
        $region13: #{tpu_custom_call.1} parent=11 // pred_check
          %p169 = pneg %p65
        $region14: #{tpu_custom_call.1} parent=11 // pred_check_branch
          %171 = sbr.rel (%p169) target = $region16
        $region15: #{tpu_custom_call.1} parent=11 // pred_region
          %s173 = ssub.s32 768, 768
          %174 = vsyncadd [#allocation6], %s173
          %s175 = sshll.u32 [#allocation5], 4
          %s176 = int_to_ptr.vmem [resolvable:$true] %s175
          %181 = dma.hbm_to_vmem [thread:$0]  %s1, 768, %s176, [#allocation6], 64, 64, 4
        $region16: #{tpu_custom_call.1} parent=11 // pred_fallthru
          _
        // Predicated region
        $region17: #{tpu_custom_call.1} parent=11 // pred_check
          %p182 = pneg %p86
        $region18: #{tpu_custom_call.1} parent=11 // pred_check_branch
          %184 = sbr.rel (%p182) target = $region20
        $region19: #{tpu_custom_call.1} parent=11 // pred_region
          _
        $region20: #{tpu_custom_call.1} parent=11 // pred_fallthru
          _
        // Predicated region
        $region21: #{tpu_custom_call.1} parent=11 // pred_check
          %p185 = pneg %p107
        $region22: #{tpu_custom_call.1} parent=11 // pred_check_branch
          %187 = sbr.rel (%p185) target = $region24
        $region23: #{tpu_custom_call.1} parent=11 // pred_region
          %s189 = ssub.s32 2048, 2048
          %190 = vsyncadd [#allocation6], %s189
          %s191 = sshll.u32 [#allocation7], 4
          %s192 = int_to_ptr.vmem [resolvable:$true] %s191
          %197 = dma.hbm_to_vmem [thread:$0]  %s3, 2048, %s192, [#allocation6], 128, 128, 8
        $region24: #{tpu_custom_call.1} parent=11 // pred_fallthru
          _
        // Predicated region
        $region25: #{tpu_custom_call.1} parent=11 // pred_check
          %p198 = pneg %p128
        $region26: #{tpu_custom_call.1} parent=11 // pred_check_branch
          %200 = sbr.rel (%p198) target = $region28
        $region27: #{tpu_custom_call.1} parent=11 // pred_region
          _
        $region28: #{tpu_custom_call.1} parent=11 // pred_fallthru
          _
      $region12: #{tpu_custom_call.1} parent=5 // pred_fallthru
        _
      %p201 = scmp.lt.s32.totalorder %s18, 2
      // Predicated region
      $region29: #{tpu_custom_call.1} parent=5 // pred_check
        %p202 = pneg %p201
      $region30: #{tpu_custom_call.1} parent=5 // pred_check_branch
        %204 = sbr.rel (%p202) target = $region32
      $region31: #{tpu_custom_call.1} parent=5 // pred_region
        // Predicated region
        $region33: #{tpu_custom_call.1} parent=31 // pred_check
          %p205 = pneg %p38
        $region34: #{tpu_custom_call.1} parent=31 // pred_check_branch
          %207 = sbr.rel (%p205) target = $region36
        $region35: #{tpu_custom_call.1} parent=31 // pred_region
          %s208 = sand.u32 %s28, 1
          %s209 = scalar_lea.sflag [#allocation3], %s208
          %s210 = sand.u32 %s28, 1
          %s211 = smul.addr %s210, 64
          %s212 = scalar_lea.vmem [#allocation2], %s211
          %s213 = smul.u32 8, %s18
          %s215 = ssub.s32 1024, 1024
          %216 = vsyncadd %s209, %s215
          %s217 = smul.addr %s213, 2
          %s218 = smul.addr %s217, 64
          %s219 = scalar_lea.hbm %s0, %s218
          %s220 = sshll.u32 %s212, 4
          %s221 = int_to_ptr.vmem [resolvable:$true] %s220
          %226 = dma.hbm_to_vmem [thread:$0]  %s219, 1024, %s221, %s209, 64, 64, 4
        $region36: #{tpu_custom_call.1} parent=31 // pred_fallthru
          _
      $region32: #{tpu_custom_call.1} parent=5 // pred_fallthru
        _
      %p227 = scmp.le.s32.totalorder 1, %s18
      %p228 = scmp.lt.s32.totalorder %s18, 3
      %p229 = pnand %p227, %p228
      %p230 = pneg %p229
      // Predicated region
      $region37: #{tpu_custom_call.1} parent=5 // pred_check
        _
      $region38: #{tpu_custom_call.1} parent=5 // pred_check_branch
        %232 = sbr.rel (%p229) target = $region40
      $region39: #{tpu_custom_call.1} parent=5 // pred_region
        %s233 = ssub.s32 %s18, 1
        %s234 = sand.u32 %s31, 1
        %s235 = scalar_lea.sflag [#allocation3], %s234
        %s236 = sand.u32 %s31, 1
        %s237 = smul.addr %s236, 64
        %s238 = scalar_lea.vmem [#allocation2], %s237
        // Predicated region
        $region41: #{tpu_custom_call.1} parent=39 // pred_check
          %p239 = pneg %p44
        $region42: #{tpu_custom_call.1} parent=39 // pred_check_branch
          %241 = sbr.rel (%p239) target = $region44
        $region43: #{tpu_custom_call.1} parent=39 // pred_region
          %242 = dma.done %s235, 1024
        $region44: #{tpu_custom_call.1} parent=39 // pred_fallthru
          _
        // Predicated region
        $region45: #{tpu_custom_call.1} parent=39 // pred_check
          %p243 = pneg %p65
        $region46: #{tpu_custom_call.1} parent=39 // pred_check_branch
          %245 = sbr.rel (%p243) target = $region48
        $region47: #{tpu_custom_call.1} parent=39 // pred_region
          %246 = dma.done [#allocation6], 768
        $region48: #{tpu_custom_call.1} parent=39 // pred_fallthru
          _
        // Predicated region
        $region49: #{tpu_custom_call.1} parent=39 // pred_check
          %p247 = pneg %p107
        $region50: #{tpu_custom_call.1} parent=39 // pred_check_branch
          %249 = sbr.rel (%p247) target = $region52
        $region51: #{tpu_custom_call.1} parent=39 // pred_region
          %250 = dma.done [#allocation6], 2048
        $region52: #{tpu_custom_call.1} parent=39 // pred_fallthru
          _
        %s251 = sand.u32 %s31, 1
        %s252 = scalar_lea.sflag [#allocation3], %s251
        %s253 = sand.u32 %s31, 1
        %s254 = smul.addr %s253, 64
        %s255 = scalar_lea.vmem [#allocation2], %s254
        %p256 = pneg %p44
        %p257 = pneg %p41
        %p258 = pneg %p65
        %p259 = pneg %p62
        %p260 = pneg %p86
        %p261 = pneg %p83
        %p262 = pneg %p107
        %p263 = pneg %p104
        %p264 = pneg %p128
        %p265 = pneg %p125
        %p266 = pneg %p154
        %p267 = pneg %p151
        %s268 = sand.u32 %s141, 1
        %s269 = scalar_lea.sflag [#allocation4], %s268
        %s270 = sand.u32 %s141, 1
        %s271 = smul.addr %s270, 8
        %s272 = scalar_lea.vmem [#allocation8], %s271
        %s273 = smul.u32 8, %s23
        %v275 = vld [vmem:[%s238] sm:$0xf]
        %v276 = vld [vmem:[%s238 + $0x4] sm:$0xf]
        %v277 = vld [vmem:[%s238 + $0x8] sm:$0xf]
        %v278 = vld [vmem:[%s238 + $0xc] sm:$0xf]
        %v279 = vld [vmem:[%s238 + $0x10] sm:$0xf]
        %v280 = vld [vmem:[%s238 + $0x14] sm:$0xf]
        %v281 = vld [vmem:[%s238 + $0x18] sm:$0xf]
        %v282 = vld [vmem:[%s238 + $0x1c] sm:$0xf]
        %v283 = vld [vmem:[%s238 + $0x20] sm:$0xf]
        %v284 = vld [vmem:[%s238 + $0x24] sm:$0xf]
        %v285 = vld [vmem:[%s238 + $0x28] sm:$0xf]
        %v286 = vld [vmem:[%s238 + $0x2c] sm:$0xf]
        %v287 = vld [vmem:[%s238 + $0x30] sm:$0xf]
        %v288 = vld [vmem:[%s238 + $0x34] sm:$0xf]
        %v289 = vld [vmem:[%s238 + $0x38] sm:$0xf]
        %v290 = vld [vmem:[%s238 + $0x3c] sm:$0xf]
        %v291 = vld [vmem:[#allocation5] sm:$0xf]
        %v292 = vld [vmem:[#allocation5 + $0x4] sm:$0xf]
        %v293 = vld [vmem:[#allocation5 + $0x8] sm:$0xf]
        %v294 = vld [vmem:[#allocation5 + $0xc] sm:$0xf]
        %v311 = vunpack.c.l.b16 %v275
        %v312 = vunpack.c.l.b16 %v276
        %v313 = vunpack.c.l.b16 %v277
        %v314 = vunpack.c.l.b16 %v278
        %v315 = vunpack.c.l.b16 %v279
        %v316 = vunpack.c.l.b16 %v280
        %v317 = vunpack.c.l.b16 %v281
        %v318 = vunpack.c.l.b16 %v282
        %v319 = vunpack.c.l.b16 %v283
        %v320 = vunpack.c.l.b16 %v284
        %v321 = vunpack.c.l.b16 %v285
        %v322 = vunpack.c.l.b16 %v286
        %v323 = vunpack.c.l.b16 %v287
        %v324 = vunpack.c.l.b16 %v288
        %v325 = vunpack.c.l.b16 %v289
        %v326 = vunpack.c.l.b16 %v290
        %v327 = vpack.c.b16 %v312, %v311
        %v328 = vpack.c.b16 %v314, %v313
        %v329 = vpack.c.b16 %v316, %v315
        %v330 = vpack.c.b16 %v318, %v317
        %v331 = vpack.c.b16 %v320, %v319
        %v332 = vpack.c.b16 %v322, %v321
        %v333 = vpack.c.b16 %v324, %v323
        %v334 = vpack.c.b16 %v326, %v325
        %v339 = vunpack.c.l.b16 %v291
        %v340 = vunpack.c.l.b16 %v292
        %v341 = vunpack.c.l.b16 %v293
        %v342 = vunpack.c.l.b16 %v294
        %v343 = vpack.c.b16 %v340, %v339
        %v344 = vpack.c.b16 %v342, %v341
        %vm347 = vcmask 261120
        %v349 = vsel %vm347, %v327, 0
        %v352 = vsel %vm347, %v328, 0
        %v355 = vsel %vm347, %v329, 0
        %v358 = vsel %vm347, %v330, 0
        %v361 = vsel %vm347, %v331, 0
        %v364 = vsel %vm347, %v332, 0
        %v367 = vsel %vm347, %v333, 0
        %v370 = vsel %vm347, %v334, 0
        %372 = vmatprep.subr.bf16.mxu0 0
        %373 = vmatpush1.bf16.msra.mxu0 %v343
        %374 = vmatprep.subr.bf16.mxu0 0
        %375 = vmatpush1.bf16.msra.mxu0 %v344
        %376 = vmatprep.subr.bf16.mxu0 0
        %377 = vmatpush1.bf16.msra.mxu0 0
        %378 = vmatprep.subr.bf16.mxu0 0
        %379 = vmatpush1.bf16.msra.mxu0 0
        %380 = vmatprep.subr.bf16.mxu0 0
        %381 = vmatpush1.bf16.msra.mxu0 0
        %382 = vmatprep.subr.bf16.mxu0 0
        %383 = vmatpush1.bf16.msra.mxu0 0
        %384 = vmatprep.subr.bf16.mxu0 0
        %385 = vmatpush1.bf16.msra.mxu0 0
        %386 = vmatprep.subr.bf16.mxu0 0
        %387 = vmatpush1.bf16.msra.mxu0 0
        %388 = vmatprep.subr.bf16.mxu0 0
        %389 = vmatpush1.bf16.msra.mxu0 0
        %390 = vmatprep.subr.bf16.mxu0 0
        %391 = vmatpush1.bf16.msra.mxu0 0
        %392 = vmatprep.subr.bf16.mxu0 0
        %393 = vmatpush1.bf16.msra.mxu0 0
        %394 = vmatprep.subr.bf16.mxu0 0
        %395 = vmatpush1.bf16.msra.mxu0 0
        %396 = vmatprep.subr.bf16.mxu0 0
        %397 = vmatpush1.bf16.msra.mxu0 0
        %398 = vmatprep.subr.bf16.mxu0 0
        %399 = vmatpush1.bf16.msra.mxu0 0
        %400 = vmatprep.subr.bf16.mxu0 0
        %401 = vmatpush1.bf16.msra.mxu0 0
        %402 = vmatprep.subr.bf16.mxu0 0
        %403 = vmatpush1.bf16.msra.mxu0 0
        %404 = vmatprep.mubr.bf16.mxu0 0
        %405 = vmatmul.mubr.bf16.gmra.mrb[0].mxu0 %v349
        %v406 = vpop.f32.mrb[0].mxu0
        %v407 = vadd.f32 0.0, %v406
        %v408 = vpop.f32.mrb[0].mxu0
        %v409 = vpop.f32.mrb[0].mxu0
        %v410 = vadd.f32 0.0, %v409
        %v411 = vpop.f32.mrb[0].mxu0
        %412 = vmatprep.mubr.bf16.mxu0 0
        %413 = vmatmul.mubr.bf16.gmra.mrb[0].mxu0 %v352
        %v414 = vpop.f32.mrb[0].mxu0
        %v415 = vadd.f32 0.0, %v414
        %v416 = vpop.f32.mrb[0].mxu0
        %v417 = vpop.f32.mrb[0].mxu0
        %v418 = vadd.f32 0.0, %v417
        %v419 = vpop.f32.mrb[0].mxu0
        %420 = vmatprep.mubr.bf16.mxu0 0
        %421 = vmatmul.mubr.bf16.gmra.mrb[0].mxu0 %v355
        %v422 = vpop.f32.mrb[0].mxu0
        %v423 = vadd.f32 0.0, %v422
        %v424 = vpop.f32.mrb[0].mxu0
        %v425 = vpop.f32.mrb[0].mxu0
        %v426 = vadd.f32 0.0, %v425
        %v427 = vpop.f32.mrb[0].mxu0
        %428 = vmatprep.mubr.bf16.mxu0 0
        %429 = vmatmul.mubr.bf16.gmra.mrb[0].mxu0 %v358
        %v430 = vpop.f32.mrb[0].mxu0
        %v431 = vadd.f32 0.0, %v430
        %v432 = vpop.f32.mrb[0].mxu0
        %v433 = vpop.f32.mrb[0].mxu0
        %v434 = vadd.f32 0.0, %v433
        %v435 = vpop.f32.mrb[0].mxu0
        %436 = vmatprep.mubr.bf16.mxu0 0
        %437 = vmatmul.mubr.bf16.gmra.mrb[0].mxu0 %v361
        %v438 = vpop.f32.mrb[0].mxu0
        %v439 = vadd.f32 0.0, %v438
        %v440 = vpop.f32.mrb[0].mxu0
        %v441 = vpop.f32.mrb[0].mxu0
        %v442 = vadd.f32 0.0, %v441
        %v443 = vpop.f32.mrb[0].mxu0
        %444 = vmatprep.mubr.bf16.mxu0 0
        %445 = vmatmul.mubr.bf16.gmra.mrb[0].mxu0 %v364
        %v446 = vpop.f32.mrb[0].mxu0
        %v447 = vadd.f32 0.0, %v446
        %v448 = vpop.f32.mrb[0].mxu0
        %v449 = vpop.f32.mrb[0].mxu0
        %v450 = vadd.f32 0.0, %v449
        %v451 = vpop.f32.mrb[0].mxu0
        %452 = vmatprep.mubr.bf16.mxu0 0
        %453 = vmatmul.mubr.bf16.gmra.mrb[0].mxu0 %v367
        %v454 = vpop.f32.mrb[0].mxu0
        %v455 = vadd.f32 0.0, %v454
        %v456 = vpop.f32.mrb[0].mxu0
        %v457 = vpop.f32.mrb[0].mxu0
        %v458 = vadd.f32 0.0, %v457
        %v459 = vpop.f32.mrb[0].mxu0
        %460 = vmatprep.mubr.bf16.mxu0 0
        %461 = vmatmul.mubr.bf16.gmra.mrb[0].mxu0 %v370
        %v462 = vpop.f32.mrb[0].mxu0
        %v463 = vadd.f32 0.0, %v462
        %v464 = vpop.f32.mrb[0].mxu0
        %v465 = vpop.f32.mrb[0].mxu0
        %v466 = vadd.f32 0.0, %v465
        %v467 = vpop.f32.mrb[0].mxu0
        %468 = vdwg.mxu0
        %vm485 = vcmask 1040384
        %v486 = vrot.slane %v407, 7
        %v487 = vrot.slane %v410, 7
        %v488 = vsel %vm485, %v486, %v487
        %v489 = vrot.slane %v415, 7
        %v490 = vrot.slane %v418, 7
        %v491 = vsel %vm485, %v489, %v490
        %v492 = vrot.slane %v423, 7
        %v493 = vrot.slane %v426, 7
        %v494 = vsel %vm485, %v492, %v493
        %v495 = vrot.slane %v431, 7
        %v496 = vrot.slane %v434, 7
        %v497 = vsel %vm485, %v495, %v496
        %v498 = vrot.slane %v439, 7
        %v499 = vrot.slane %v442, 7
        %v500 = vsel %vm485, %v498, %v499
        %v501 = vrot.slane %v447, 7
        %v502 = vrot.slane %v450, 7
        %v503 = vsel %vm485, %v501, %v502
        %v504 = vrot.slane %v455, 7
        %v505 = vrot.slane %v458, 7
        %v506 = vsel %vm485, %v504, %v505
        %v507 = vrot.slane %v463, 7
        %v508 = vrot.slane %v466, 7
        %v509 = vsel %vm485, %v507, %v508
        %v526 = vsel %vm485, 0.0, %v486
        %v527 = vsel %vm485, 0.0, %v489
        %v528 = vsel %vm485, 0.0, %v492
        %v529 = vsel %vm485, 0.0, %v495
        %v530 = vsel %vm485, 0.0, %v498
        %v531 = vsel %vm485, 0.0, %v501
        %v532 = vsel %vm485, 0.0, %v504
        %v533 = vsel %vm485, 0.0, %v507
        %v534 = vadd.f32 %v526, 0.0
        %v535 = vadd.f32 %v488, 0.0
        %v536 = vadd.f32 %v527, 0.0
        %v537 = vadd.f32 %v491, 0.0
        %v538 = vadd.f32 %v528, 0.0
        %v539 = vadd.f32 %v494, 0.0
        %v540 = vadd.f32 %v529, 0.0
        %v541 = vadd.f32 %v497, 0.0
        %v542 = vadd.f32 %v530, 0.0
        %v543 = vadd.f32 %v500, 0.0
        %v544 = vadd.f32 %v531, 0.0
        %v545 = vadd.f32 %v503, 0.0
        %v546 = vadd.f32 %v532, 0.0
        %v547 = vadd.f32 %v506, 0.0
        %v548 = vadd.f32 %v533, 0.0
        %v549 = vadd.f32 %v509, 0.0
        %s550 = scalar_lea.vmem [#allocation5], 16
        %v551 = vld [vmem:[%s550] sm:$0xf]
        %v552 = vld [vmem:[%s550 + $0x4] sm:$0xf]
        %v553 = vld [vmem:[%s550 + $0x8] sm:$0xf]
        %v554 = vld [vmem:[%s550 + $0xc] sm:$0xf]
        %v559 = vunpack.c.l.b16 %v551
        %v560 = vunpack.c.l.b16 %v552
        %v561 = vunpack.c.l.b16 %v553
        %v562 = vunpack.c.l.b16 %v554
        %v563 = vpack.c.b16 %v560, %v559
        %v564 = vpack.c.b16 %v562, %v561
        %567 = vmatprep.subr.bf16.mxu0 0
        %568 = vmatpush1.bf16.msra.mxu0 %v563
        %569 = vmatprep.subr.bf16.mxu0 0
        %570 = vmatpush1.bf16.msra.mxu0 %v564
        %571 = vmatprep.subr.bf16.mxu0 0
        %572 = vmatpush1.bf16.msra.mxu0 0
        %573 = vmatprep.subr.bf16.mxu0 0
        %574 = vmatpush1.bf16.msra.mxu0 0
        %575 = vmatprep.subr.bf16.mxu0 0
        %576 = vmatpush1.bf16.msra.mxu0 0
        %577 = vmatprep.subr.bf16.mxu0 0
        %578 = vmatpush1.bf16.msra.mxu0 0
        %579 = vmatprep.subr.bf16.mxu0 0
        %580 = vmatpush1.bf16.msra.mxu0 0
        %581 = vmatprep.subr.bf16.mxu0 0
        %582 = vmatpush1.bf16.msra.mxu0 0
        %583 = vmatprep.subr.bf16.mxu0 0
        %584 = vmatpush1.bf16.msra.mxu0 0
        %585 = vmatprep.subr.bf16.mxu0 0
        %586 = vmatpush1.bf16.msra.mxu0 0
        %587 = vmatprep.subr.bf16.mxu0 0
        %588 = vmatpush1.bf16.msra.mxu0 0
        %589 = vmatprep.subr.bf16.mxu0 0
        %590 = vmatpush1.bf16.msra.mxu0 0
        %591 = vmatprep.subr.bf16.mxu0 0
        %592 = vmatpush1.bf16.msra.mxu0 0
        %593 = vmatprep.subr.bf16.mxu0 0
        %594 = vmatpush1.bf16.msra.mxu0 0
        %595 = vmatprep.subr.bf16.mxu0 0
        %596 = vmatpush1.bf16.msra.mxu0 0
        %597 = vmatprep.subr.bf16.mxu0 0
        %598 = vmatpush1.bf16.msra.mxu0 0
        %599 = vmatprep.mubr.bf16.mxu0 0
        %600 = vmatmul.mubr.bf16.gmra.mrb[0].mxu0 %v349
        %v601 = vpop.f32.mrb[0].mxu0
        %v602 = vadd.f32 0.0, %v601
        %v603 = vpop.f32.mrb[0].mxu0
        %v604 = vpop.f32.mrb[0].mxu0
        %v605 = vadd.f32 0.0, %v604
        %v606 = vpop.f32.mrb[0].mxu0
        %607 = vmatprep.mubr.bf16.mxu0 0
        %608 = vmatmul.mubr.bf16.gmra.mrb[0].mxu0 %v352
        %v609 = vpop.f32.mrb[0].mxu0
        %v610 = vadd.f32 0.0, %v609
        %v611 = vpop.f32.mrb[0].mxu0
        %v612 = vpop.f32.mrb[0].mxu0
        %v613 = vadd.f32 0.0, %v612
        %v614 = vpop.f32.mrb[0].mxu0
        %615 = vmatprep.mubr.bf16.mxu0 0
        %616 = vmatmul.mubr.bf16.gmra.mrb[0].mxu0 %v355
        %v617 = vpop.f32.mrb[0].mxu0
        %v618 = vadd.f32 0.0, %v617
        %v619 = vpop.f32.mrb[0].mxu0
        %v620 = vpop.f32.mrb[0].mxu0
        %v621 = vadd.f32 0.0, %v620
        %v622 = vpop.f32.mrb[0].mxu0
        %623 = vmatprep.mubr.bf16.mxu0 0
        %624 = vmatmul.mubr.bf16.gmra.mrb[0].mxu0 %v358
        %v625 = vpop.f32.mrb[0].mxu0
        %v626 = vadd.f32 0.0, %v625
        %v627 = vpop.f32.mrb[0].mxu0
        %v628 = vpop.f32.mrb[0].mxu0
        %v629 = vadd.f32 0.0, %v628
        %v630 = vpop.f32.mrb[0].mxu0
        %631 = vmatprep.mubr.bf16.mxu0 0
        %632 = vmatmul.mubr.bf16.gmra.mrb[0].mxu0 %v361
        %v633 = vpop.f32.mrb[0].mxu0
        %v634 = vadd.f32 0.0, %v633
        %v635 = vpop.f32.mrb[0].mxu0
        %v636 = vpop.f32.mrb[0].mxu0
        %v637 = vadd.f32 0.0, %v636
        %v638 = vpop.f32.mrb[0].mxu0
        %639 = vmatprep.mubr.bf16.mxu0 0
        %640 = vmatmul.mubr.bf16.gmra.mrb[0].mxu0 %v364
        %v641 = vpop.f32.mrb[0].mxu0
        %v642 = vadd.f32 0.0, %v641
        %v643 = vpop.f32.mrb[0].mxu0
        %v644 = vpop.f32.mrb[0].mxu0
        %v645 = vadd.f32 0.0, %v644
        %v646 = vpop.f32.mrb[0].mxu0
        %647 = vmatprep.mubr.bf16.mxu0 0
        %648 = vmatmul.mubr.bf16.gmra.mrb[0].mxu0 %v367
        %v649 = vpop.f32.mrb[0].mxu0
        %v650 = vadd.f32 0.0, %v649
        %v651 = vpop.f32.mrb[0].mxu0
        %v652 = vpop.f32.mrb[0].mxu0
        %v653 = vadd.f32 0.0, %v652
        %v654 = vpop.f32.mrb[0].mxu0
        %655 = vmatprep.mubr.bf16.mxu0 0
        %656 = vmatmul.mubr.bf16.gmra.mrb[0].mxu0 %v370
        %v657 = vpop.f32.mrb[0].mxu0
        %v658 = vadd.f32 0.0, %v657
        %v659 = vpop.f32.mrb[0].mxu0
        %v660 = vpop.f32.mrb[0].mxu0
        %v661 = vadd.f32 0.0, %v660
        %v662 = vpop.f32.mrb[0].mxu0
        %663 = vdwg.mxu0
        %v664 = vadd.f32 %v534, %v602
        %v665 = vadd.f32 %v535, %v605
        %v666 = vadd.f32 %v536, %v610
        %v667 = vadd.f32 %v537, %v613
        %v668 = vadd.f32 %v538, %v618
        %v669 = vadd.f32 %v539, %v621
        %v670 = vadd.f32 %v540, %v626
        %v671 = vadd.f32 %v541, %v629
        %v672 = vadd.f32 %v542, %v634
        %v673 = vadd.f32 %v543, %v637
        %v674 = vadd.f32 %v544, %v642
        %v675 = vadd.f32 %v545, %v645
        %v676 = vadd.f32 %v546, %v650
        %v677 = vadd.f32 %v547, %v653
        %v678 = vadd.f32 %v548, %v658
        %v679 = vadd.f32 %v549, %v661
        %s680 = scalar_lea.vmem [#allocation5], 32
        %v681 = vld [vmem:[%s680] sm:$0xf]
        %v682 = vld [vmem:[%s680 + $0x4] sm:$0xf]
        %v683 = vld [vmem:[%s680 + $0x8] sm:$0xf]
        %v684 = vld [vmem:[%s680 + $0xc] sm:$0xf]
        %v689 = vunpack.c.l.b16 %v681
        %v690 = vunpack.c.l.b16 %v682
        %v691 = vunpack.c.l.b16 %v683
        %v692 = vunpack.c.l.b16 %v684
        %v693 = vpack.c.b16 %v690, %v689
        %v694 = vpack.c.b16 %v692, %v691
        %697 = vmatprep.subr.bf16.mxu0 0
        %698 = vmatpush1.bf16.msra.mxu0 %v693
        %699 = vmatprep.subr.bf16.mxu0 0
        %700 = vmatpush1.bf16.msra.mxu0 %v694
        %701 = vmatprep.subr.bf16.mxu0 0
        %702 = vmatpush1.bf16.msra.mxu0 0
        %703 = vmatprep.subr.bf16.mxu0 0
        %704 = vmatpush1.bf16.msra.mxu0 0
        %705 = vmatprep.subr.bf16.mxu0 0
        %706 = vmatpush1.bf16.msra.mxu0 0
        %707 = vmatprep.subr.bf16.mxu0 0
        %708 = vmatpush1.bf16.msra.mxu0 0
        %709 = vmatprep.subr.bf16.mxu0 0
        %710 = vmatpush1.bf16.msra.mxu0 0
        %711 = vmatprep.subr.bf16.mxu0 0
        %712 = vmatpush1.bf16.msra.mxu0 0
        %713 = vmatprep.subr.bf16.mxu0 0
        %714 = vmatpush1.bf16.msra.mxu0 0
        %715 = vmatprep.subr.bf16.mxu0 0
        %716 = vmatpush1.bf16.msra.mxu0 0
        %717 = vmatprep.subr.bf16.mxu0 0
        %718 = vmatpush1.bf16.msra.mxu0 0
        %719 = vmatprep.subr.bf16.mxu0 0
        %720 = vmatpush1.bf16.msra.mxu0 0
        %721 = vmatprep.subr.bf16.mxu0 0
        %722 = vmatpush1.bf16.msra.mxu0 0
        %723 = vmatprep.subr.bf16.mxu0 0
        %724 = vmatpush1.bf16.msra.mxu0 0
        %725 = vmatprep.subr.bf16.mxu0 0
        %726 = vmatpush1.bf16.msra.mxu0 0
        %727 = vmatprep.subr.bf16.mxu0 0
        %728 = vmatpush1.bf16.msra.mxu0 0
        %729 = vmatprep.mubr.bf16.mxu0 0
        %730 = vmatmul.mubr.bf16.gmra.mrb[0].mxu0 %v349
        %v731 = vpop.f32.mrb[0].mxu0
        %v732 = vadd.f32 0.0, %v731
        %v733 = vpop.f32.mrb[0].mxu0
        %v734 = vpop.f32.mrb[0].mxu0
        %v735 = vadd.f32 0.0, %v734
        %v736 = vpop.f32.mrb[0].mxu0
        %737 = vmatprep.mubr.bf16.mxu0 0
        %738 = vmatmul.mubr.bf16.gmra.mrb[0].mxu0 %v352
        %v739 = vpop.f32.mrb[0].mxu0
        %v740 = vadd.f32 0.0, %v739
        %v741 = vpop.f32.mrb[0].mxu0
        %v742 = vpop.f32.mrb[0].mxu0
        %v743 = vadd.f32 0.0, %v742
        %v744 = vpop.f32.mrb[0].mxu0
        %745 = vmatprep.mubr.bf16.mxu0 0
        %746 = vmatmul.mubr.bf16.gmra.mrb[0].mxu0 %v355
        %v747 = vpop.f32.mrb[0].mxu0
        %v748 = vadd.f32 0.0, %v747
        %v749 = vpop.f32.mrb[0].mxu0
        %v750 = vpop.f32.mrb[0].mxu0
        %v751 = vadd.f32 0.0, %v750
        %v752 = vpop.f32.mrb[0].mxu0
        %753 = vmatprep.mubr.bf16.mxu0 0
        %754 = vmatmul.mubr.bf16.gmra.mrb[0].mxu0 %v358
        %v755 = vpop.f32.mrb[0].mxu0
        %v756 = vadd.f32 0.0, %v755
        %v757 = vpop.f32.mrb[0].mxu0
        %v758 = vpop.f32.mrb[0].mxu0
        %v759 = vadd.f32 0.0, %v758
        %v760 = vpop.f32.mrb[0].mxu0
        %761 = vmatprep.mubr.bf16.mxu0 0
        %762 = vmatmul.mubr.bf16.gmra.mrb[0].mxu0 %v361
        %v763 = vpop.f32.mrb[0].mxu0
        %v764 = vadd.f32 0.0, %v763
        %v765 = vpop.f32.mrb[0].mxu0
        %v766 = vpop.f32.mrb[0].mxu0
        %v767 = vadd.f32 0.0, %v766
        %v768 = vpop.f32.mrb[0].mxu0
        %769 = vmatprep.mubr.bf16.mxu0 0
        %770 = vmatmul.mubr.bf16.gmra.mrb[0].mxu0 %v364
        %v771 = vpop.f32.mrb[0].mxu0
        %v772 = vadd.f32 0.0, %v771
        %v773 = vpop.f32.mrb[0].mxu0
        %v774 = vpop.f32.mrb[0].mxu0
        %v775 = vadd.f32 0.0, %v774
        %v776 = vpop.f32.mrb[0].mxu0
        %777 = vmatprep.mubr.bf16.mxu0 0
        %778 = vmatmul.mubr.bf16.gmra.mrb[0].mxu0 %v367
        %v779 = vpop.f32.mrb[0].mxu0
        %v780 = vadd.f32 0.0, %v779
        %v781 = vpop.f32.mrb[0].mxu0
        %v782 = vpop.f32.mrb[0].mxu0
        %v783 = vadd.f32 0.0, %v782
        %v784 = vpop.f32.mrb[0].mxu0
        %785 = vmatprep.mubr.bf16.mxu0 0
        %786 = vmatmul.mubr.bf16.gmra.mrb[0].mxu0 %v370
        %v787 = vpop.f32.mrb[0].mxu0
        %v788 = vadd.f32 0.0, %v787
        %v789 = vpop.f32.mrb[0].mxu0
        %v790 = vpop.f32.mrb[0].mxu0
        %v791 = vadd.f32 0.0, %v790
        %v792 = vpop.f32.mrb[0].mxu0
        %793 = vdwg.mxu0
        %vm810 = vcmask 1046528
        %v811 = vrot.slane %v732, 1
        %v812 = vrot.slane %v735, 1
        %v813 = vsel %vm810, %v811, %v812
        %v814 = vrot.slane %v740, 1
        %v815 = vrot.slane %v743, 1
        %v816 = vsel %vm810, %v814, %v815
        %v817 = vrot.slane %v748, 1
        %v818 = vrot.slane %v751, 1
        %v819 = vsel %vm810, %v817, %v818
        %v820 = vrot.slane %v756, 1
        %v821 = vrot.slane %v759, 1
        %v822 = vsel %vm810, %v820, %v821
        %v823 = vrot.slane %v764, 1
        %v824 = vrot.slane %v767, 1
        %v825 = vsel %vm810, %v823, %v824
        %v826 = vrot.slane %v772, 1
        %v827 = vrot.slane %v775, 1
        %v828 = vsel %vm810, %v826, %v827
        %v829 = vrot.slane %v780, 1
        %v830 = vrot.slane %v783, 1
        %v831 = vsel %vm810, %v829, %v830
        %v832 = vrot.slane %v788, 1
        %v833 = vrot.slane %v791, 1
        %v834 = vsel %vm810, %v832, %v833
        %v851 = vsel %vm810, %v812, 0.0
        %v852 = vsel %vm810, %v815, 0.0
        %v853 = vsel %vm810, %v818, 0.0
        %v854 = vsel %vm810, %v821, 0.0
        %v855 = vsel %vm810, %v824, 0.0
        %v856 = vsel %vm810, %v827, 0.0
        %v857 = vsel %vm810, %v830, 0.0
        %v858 = vsel %vm810, %v833, 0.0
        %v859 = vadd.f32 %v664, %v813
        %v860 = vadd.f32 %v665, %v851
        %v861 = vadd.f32 %v666, %v816
        %v862 = vadd.f32 %v667, %v852
        %v863 = vadd.f32 %v668, %v819
        %v864 = vadd.f32 %v669, %v853
        %v865 = vadd.f32 %v670, %v822
        %v866 = vadd.f32 %v671, %v854
        %v867 = vadd.f32 %v672, %v825
        %v868 = vadd.f32 %v673, %v855
        %v869 = vadd.f32 %v674, %v828
        %v870 = vadd.f32 %v675, %v856
        %v871 = vadd.f32 %v676, %v831
        %v872 = vadd.f32 %v677, %v857
        %v873 = vadd.f32 %v678, %v834
        %v874 = vadd.f32 %v679, %v858
        %v875 = vld [vmem:[%s2] sm:$0x1]
        %v877 = vlaneseq
        %v878 = vshrl.u32 %v877, 7
        %v879 = vsub.s32 0, %v878
        %v880 = vrot.slane %v875, %v879
        %v882 = vadd.f32 %v859, %v880
        %v883 = vadd.f32 %v860, %v880
        %v884 = vadd.f32 %v861, %v880
        %v885 = vadd.f32 %v862, %v880
        %v886 = vadd.f32 %v863, %v880
        %v887 = vadd.f32 %v864, %v880
        %v888 = vadd.f32 %v865, %v880
        %v889 = vadd.f32 %v866, %v880
        %v890 = vadd.f32 %v867, %v880
        %v891 = vadd.f32 %v868, %v880
        %v892 = vadd.f32 %v869, %v880
        %v893 = vadd.f32 %v870, %v880
        %v894 = vadd.f32 %v871, %v880
        %v895 = vadd.f32 %v872, %v880
        %v896 = vadd.f32 %v873, %v880
        %v897 = vadd.f32 %v874, %v880
        %v898 = vmax.f32 %v882, 0.0
        %v899 = vmax.f32 %v883, 0.0
        %v900 = vmax.f32 %v884, 0.0
        %v901 = vmax.f32 %v885, 0.0
        %v902 = vmax.f32 %v886, 0.0
        %v903 = vmax.f32 %v887, 0.0
        %v904 = vmax.f32 %v888, 0.0
        %v905 = vmax.f32 %v889, 0.0
        %v906 = vmax.f32 %v890, 0.0
        %v907 = vmax.f32 %v891, 0.0
        %v908 = vmax.f32 %v892, 0.0
        %v909 = vmax.f32 %v893, 0.0
        %v910 = vmax.f32 %v894, 0.0
        %v911 = vmax.f32 %v895, 0.0
        %v912 = vmax.f32 %v896, 0.0
        %v913 = vmax.f32 %v897, 0.0
        %v914 = vmax.f32 %v898, %v899
        %v915 = vrot.slane %v914, 4
        %v916 = vmax.f32 %v914, %v915
        %v917 = vrot.slane %v916, 2
        %v918 = vmax.f32 %v916, %v917
        %v919 = vrot.slane %v918, 1
        %v920 = vmax.f32 %v918, %v919
        %v921 = vmax.f32 %v900, %v901
        %v922 = vrot.slane %v921, 4
        %v923 = vmax.f32 %v921, %v922
        %v924 = vrot.slane %v923, 2
        %v925 = vmax.f32 %v923, %v924
        %v926 = vrot.slane %v925, 1
        %v927 = vmax.f32 %v925, %v926
        %v928 = vmax.f32 %v902, %v903
        %v929 = vrot.slane %v928, 4
        %v930 = vmax.f32 %v928, %v929
        %v931 = vrot.slane %v930, 2
        %v932 = vmax.f32 %v930, %v931
        %v933 = vrot.slane %v932, 1
        %v934 = vmax.f32 %v932, %v933
        %v935 = vmax.f32 %v904, %v905
        %v936 = vrot.slane %v935, 4
        %v937 = vmax.f32 %v935, %v936
        %v938 = vrot.slane %v937, 2
        %v939 = vmax.f32 %v937, %v938
        %v940 = vrot.slane %v939, 1
        %v941 = vmax.f32 %v939, %v940
        %v942 = vmax.f32 %v906, %v907
        %v943 = vrot.slane %v942, 4
        %v944 = vmax.f32 %v942, %v943
        %v945 = vrot.slane %v944, 2
        %v946 = vmax.f32 %v944, %v945
        %v947 = vrot.slane %v946, 1
        %v948 = vmax.f32 %v946, %v947
        %v949 = vmax.f32 %v908, %v909
        %v950 = vrot.slane %v949, 4
        %v951 = vmax.f32 %v949, %v950
        %v952 = vrot.slane %v951, 2
        %v953 = vmax.f32 %v951, %v952
        %v954 = vrot.slane %v953, 1
        %v955 = vmax.f32 %v953, %v954
        %v956 = vmax.f32 %v910, %v911
        %v957 = vrot.slane %v956, 4
        %v958 = vmax.f32 %v956, %v957
        %v959 = vrot.slane %v958, 2
        %v960 = vmax.f32 %v958, %v959
        %v961 = vrot.slane %v960, 1
        %v962 = vmax.f32 %v960, %v961
        %v963 = vmax.f32 %v912, %v913
        %v964 = vrot.slane %v963, 4
        %v965 = vmax.f32 %v963, %v964
        %v966 = vrot.slane %v965, 2
        %v967 = vmax.f32 %v965, %v966
        %v968 = vrot.slane %v967, 1
        %v969 = vmax.f32 %v967, %v968
        %v970 = vld [vmem:[#allocation7] sm:$0xff]
        %v971 = vld [vmem:[#allocation7 + $0x8] sm:$0xff]
        %v972 = vld [vmem:[#allocation7 + $0x10] sm:$0xff]
        %v973 = vld [vmem:[#allocation7 + $0x18] sm:$0xff]
        %v974 = vld [vmem:[#allocation7 + $0x20] sm:$0xff]
        %v975 = vld [vmem:[#allocation7 + $0x28] sm:$0xff]
        %v976 = vld [vmem:[#allocation7 + $0x30] sm:$0xff]
        %v977 = vld [vmem:[#allocation7 + $0x38] sm:$0xff]
        %v978 = vld [vmem:[#allocation7 + $0x40] sm:$0xff]
        %v979 = vld [vmem:[#allocation7 + $0x48] sm:$0xff]
        %v980 = vld [vmem:[#allocation7 + $0x50] sm:$0xff]
        %v981 = vld [vmem:[#allocation7 + $0x58] sm:$0xff]
        %v982 = vld [vmem:[#allocation7 + $0x60] sm:$0xff]
        %v983 = vld [vmem:[#allocation7 + $0x68] sm:$0xff]
        %v984 = vld [vmem:[#allocation7 + $0x70] sm:$0xff]
        %v985 = vld [vmem:[#allocation7 + $0x78] sm:$0xff]
        %v986 = vld [vmem:[%s4] sm:$0x1]
        %v988 = vlaneseq
        %v989 = vshrl.u32 %v988, 7
        %v990 = vsub.s32 0, %v989
        %v991 = vrot.slane %v986, %v990
        %vm1001 = vcmask 1041409
        %v1002 = vsel %vm1001, %v927, %v920
        %vm1003 = vcmask 1042434
        %v1004 = vsel %vm1003, %v934, %v1002
        %vm1005 = vcmask 1043459
        %v1006 = vsel %vm1005, %v941, %v1004
        %vm1007 = vcmask 1044484
        %v1008 = vsel %vm1007, %v948, %v1006
        %vm1009 = vcmask 1045509
        %v1010 = vsel %vm1009, %v955, %v1008
        %vm1011 = vcmask 1046534
        %v1012 = vsel %vm1011, %v962, %v1010
        %vm1013 = vcmask 1047559
        %v1014 = vsel %vm1013, %v969, %v1012
        %1016 = vmatprep.subr.mxu0 0.0
        %1017 = vmatpush1.msra.mxu0 %v970
        %1018 = vmatprep.subr.mxu0 0.0
        %1019 = vmatpush1.msra.mxu0 %v971
        %1020 = vmatprep.subr.mxu0 0.0
        %1021 = vmatpush1.msra.mxu0 %v972
        %1022 = vmatprep.subr.mxu0 0.0
        %1023 = vmatpush1.msra.mxu0 %v973
        %1024 = vmatprep.subr.mxu0 0.0
        %1025 = vmatpush1.msra.mxu0 %v974
        %1026 = vmatprep.subr.mxu0 0.0
        %1027 = vmatpush1.msra.mxu0 %v975
        %1028 = vmatprep.subr.mxu0 0.0
        %1029 = vmatpush1.msra.mxu0 %v976
        %1030 = vmatprep.subr.mxu0 0.0
        %1031 = vmatpush1.msra.mxu0 %v977
        %1032 = vmatprep.subr.mxu0 0.0
        %1033 = vmatpush1.msra.mxu0 %v978
        %1034 = vmatprep.subr.mxu0 0.0
        %1035 = vmatpush1.msra.mxu0 %v979
        %1036 = vmatprep.subr.mxu0 0.0
        %1037 = vmatpush1.msra.mxu0 %v980
        %1038 = vmatprep.subr.mxu0 0.0
        %1039 = vmatpush1.msra.mxu0 %v981
        %1040 = vmatprep.subr.mxu0 0.0
        %1041 = vmatpush1.msra.mxu0 %v982
        %1042 = vmatprep.subr.mxu0 0.0
        %1043 = vmatpush1.msra.mxu0 %v983
        %1044 = vmatprep.subr.mxu0 0.0
        %1045 = vmatpush1.msra.mxu0 %v984
        %1046 = vmatprep.subr.mxu0 0.0
        %1047 = vmatpush1.msra.mxu0 %v985
        %1048 = vmatprep.subr.mxu0 0.0
        %1049 = vmatpush1.msra.mxu0 0.0
        %1050 = vmatprep.subr.mxu0 0.0
        %1051 = vmatpush1.msra.mxu0 0.0
        %1052 = vmatprep.subr.mxu0 0.0
        %1053 = vmatpush1.msra.mxu0 0.0
        %1054 = vmatprep.subr.mxu0 0.0
        %1055 = vmatpush1.msra.mxu0 0.0
        %1056 = vmatprep.subr.mxu0 0.0
        %1057 = vmatpush1.msra.mxu0 0.0
        %1058 = vmatprep.subr.mxu0 0.0
        %1059 = vmatpush1.msra.mxu0 0.0
        %1060 = vmatprep.subr.mxu0 0.0
        %1061 = vmatpush1.msra.mxu0 0.0
        %1062 = vmatprep.subr.mxu0 0.0
        %1063 = vmatpush1.msra.mxu0 0.0
        %1064 = vmatprep.subr.mxu0 0.0
        %1065 = vmatpush1.msra.mxu0 0.0
        %1066 = vmatprep.subr.mxu0 0.0
        %1067 = vmatpush1.msra.mxu0 0.0
        %1068 = vmatprep.subr.mxu0 0.0
        %1069 = vmatpush1.msra.mxu0 0.0
        %1070 = vmatprep.subr.mxu0 0.0
        %1071 = vmatpush1.msra.mxu0 0.0
        %1072 = vmatprep.subr.mxu0 0.0
        %1073 = vmatpush1.msra.mxu0 0.0
        %1074 = vmatprep.subr.mxu0 0.0
        %1075 = vmatpush1.msra.mxu0 0.0
        %1076 = vmatprep.subr.mxu0 0.0
        %1077 = vmatpush1.msra.mxu0 0.0
        %1078 = vmatprep.subr.mxu0 0.0
        %1079 = vmatpush1.msra.mxu0 0.0
        %1080 = vmatprep.mubr.f32.mxu0 0.0
        %1081 = vmatmul.mubr.f32.gmra.mrb[0].mxu0 %v1014
        %v1082 = vpop.f32.mrb[0].mxu0
        %v1083 = vadd.f32 %v991, %v1082
        %v1084 = vpop.f32.mrb[0].mxu0
        %1085 = vdwg.mxu0
        %1086 = vst [vmem:[%s272] sm:$0xff] %v1083
        %s1087 = sand.u32 %s141, 1
        %s1088 = scalar_lea.sflag [#allocation4], %s1087
        %s1089 = sand.u32 %s141, 1
        %s1090 = smul.addr %s1089, 8
        %s1091 = scalar_lea.vmem [#allocation8], %s1090
        // Predicated region
        $region53: #{tpu_custom_call.1} parent=39 // pred_check
          %p1092 = pneg %p151
        $region54: #{tpu_custom_call.1} parent=39 // pred_check_branch
          %1094 = sbr.rel (%p1092) target = $region56
        $region55: #{tpu_custom_call.1} parent=39 // pred_region
          %s1096 = ssub.s32 128, 128
          %1097 = vsyncadd %s1088, %s1096
          %s1098 = smul.addr %s23, 128
          %s1099 = scalar_lea.hbm %s5, %s1098
          %s1101 = sshll.u32 %s1091, 4
          %s1102 = int_to_ptr.vmem [resolvable:$true] %s1101
          %1104 = dma.vmem_to_hbm [thread:$0]  %s1102, 128, %s1099, %s1088
        $region56: #{tpu_custom_call.1} parent=39 // pred_fallthru
          _
      $region40: #{tpu_custom_call.1} parent=5 // pred_fallthru
        _
      %p1105 = scmp.le.s32.totalorder 2, %s18
      // Predicated region
      $region57: #{tpu_custom_call.1} parent=5 // pred_check
        %p1106 = pneg %p1105
      $region58: #{tpu_custom_call.1} parent=5 // pred_check_branch
        %1108 = sbr.rel (%p1106) target = $region60
      $region59: #{tpu_custom_call.1} parent=5 // pred_region
        %s1109 = ssub.s32 %s18, 2
        // Predicated region
        $region61: #{tpu_custom_call.1} parent=59 // pred_check
          %p1110 = pneg %p157
        $region62: #{tpu_custom_call.1} parent=59 // pred_check_branch
          %1112 = sbr.rel (%p1110) target = $region64
        $region63: #{tpu_custom_call.1} parent=59 // pred_region
          %s1113 = sand.u32 %s142, 1
          %s1114 = scalar_lea.sflag [#allocation4], %s1113
          %s1115 = sand.u32 %s142, 1
          %s1116 = smul.addr %s1115, 8
          %s1117 = scalar_lea.vmem [#allocation8], %s1116
          %1118 = dma.done %s1114, 128
        $region64: #{tpu_custom_call.1} parent=59 // pred_fallthru
          _
      $region60: #{tpu_custom_call.1} parent=5 // pred_fallthru
        _
    $region6: #{tpu_custom_call.1} parent=1 // loop_footer
      %s22 = sadd.s32 1, %s18
    $region7: #{tpu_custom_call.1} parent=1 // loop_footer_branch
      %17 = sbr.rel target = $region3
    $region8: #{tpu_custom_call.1} parent=1 // loop_exit
      _
    %1119 = vsyncpa [#allocation3], 1
    %s1120 = scalar_lea.sflag [#allocation3], 1
    %1121 = vsyncpa %s1120, 1
    %1122 = vsyncpa [#allocation6], 1
    %1123 = vsyncpa [#allocation4], 1
    %s1124 = scalar_lea.sflag [#allocation4], 1
    %1125 = vsyncpa %s1124, 1

</llo_original>
